<compile_context>
chip_gen: v6e
topology: v6e:2x2x1
jax: 0.10.0
libtpu: 0.0.40
codegen_flags: <defaults>
</compile_context>

<pallas_src>
import numpy as np
import jax
import jax.numpy as jnp
from jax.experimental import pallas as pl
from jax.experimental.pallas import tpu as pltpu


def _cdiv(a, b):
    return -(-a // b)


def _make_kernel(active):
    def kernel(tile_ref, blk_ref, first_ref, last_ref,    # scalar prefetch (SMEM)
               dst_ref, xsrc_ref, x_ref, wt_ref,           # VMEM input blocks
               o_ref,                                      # VMEM output block
               acc_ref, rows_ref):                         # scratch (f32 acc, row iota)
        c = pl.program_id(0)
        t = pl.program_id(1)
        flat = c * pl.num_programs(1) + t
        tm = acc_ref.shape[0]
        tk = dst_ref.shape[1]

        # Row-index constant, materialized once per core (hoisted out of the hot loop).
        @pl.when(t == 0)
        def _rows_init():
            rows_ref[...] = jax.lax.broadcasted_iota(jnp.int32, (tm, tk), 0)

        @pl.when(first_ref[flat] == 1)
        def _acc_init():
            acc_ref[...] = jnp.zeros_like(acc_ref)

        # One-hot scatter of this (tile-private) edge block into the tile's tm rows.
        # Padding edges carry dst = -1 and therefore match no row.
        local = dst_ref[...] - tile_ref[flat] * tm                    # (1, tk) int32
        onehot = (rows_ref[...] == local).astype(xsrc_ref.dtype)      # bare compare+cast
        acc_ref[...] += jnp.dot(onehot, xsrc_ref[...],
                                preferred_element_type=jnp.float32)

        @pl.when(last_ref[flat] == 1)
        def _epilogue():
            feat = x_ref[...].astype(jnp.float32) + acc_ref[...]      # (tm, in_dim) f32
            out = jnp.dot(feat.astype(wt_ref.dtype), wt_ref[...],
                          preferred_element_type=jnp.float32)
            if active == "sigmoid":
                out = jax.nn.sigmoid(out)
            elif active == "tanh":
                out = jnp.tanh(out)
            else:
                out = jnp.maximum(out, 0.0)
            o_ref[...] = out.astype(o_ref.dtype)

    return kernel


def wgcn_layer_forward(nodes_embed, edges, fc_weight, relation_weight, *,
                       active="relu", tm=128, tk=512, n_cores=2,
                       compute_dtype=jnp.bfloat16):
    """WGCNLayer forward (bias=False).

    nodes_embed: (N, in_dim) f32; edges: (E, 3) int32 [src, rel, dst];
    fc_weight: (out_dim, in_dim) f32; relation_weight: (R, 1) f32.
    """
    N, in_dim = nodes_embed.shape
    out_dim = fc_weight.shape[0]
    assert tm % 16 == 0 and tk % 128 == 0     # tm % 16 covers bf16 sublane packing

    n_tiles = _cdiv(N, tm)
    N_pad = n_tiles * tm
    n_cores = max(1, min(n_cores, n_tiles))

    # ------- host-side metadata (concrete numpy).  Under jit this whole section must
    # be precomputed by the caller and passed in as arguments.
    # TODO(synk): traced-edges (jit) metadata path not implemented; edges must be concrete.
    edges_np = np.asarray(jax.device_get(edges)).astype(np.int64)
    src_np, rel_np, dst_np = edges_np[:, 0], edges_np[:, 1], edges_np[:, 2]
    order = np.argsort(dst_np, kind="stable")
    src_s, rel_s, dst_s = src_np[order], rel_np[order], dst_np[order]

    bounds = np.arange(n_tiles + 1, dtype=np.int64) * tm
    seg = np.searchsorted(dst_s, bounds)                       # (n_tiles + 1,)
    seg_len = seg[1:] - seg[:-1]
    blocks_per_tile = np.maximum(-(-seg_len // tk), 1)         # >=1 block per tile so the
    tile_first_block = np.concatenate(                         # epilogue always runs
        [[0], np.cumsum(blocks_per_tile)[:-1]]).astype(np.int64)
    total_blocks = int(blocks_per_tile.sum())
    dummy_block = total_blocks                                 # all-padding trailing block
    E_slab = (total_blocks + 1) * tk

    # Tile-private edge layout: each (tk, in_dim) block belongs to exactly one node tile,
    # so no block is DMA'd or scatter-matmul'd twice.
    src_p = np.zeros(E_slab, np.int32)
    rel_p = np.zeros(E_slab, np.int32)
    dst_p = np.full(E_slab, -1, np.int32)                      # -1 never matches a row
    if dst_s.size:
        tile_of_edge = dst_s // tm
        local_pos = np.arange(dst_s.size, dtype=np.int64) - seg[tile_of_edge]
        pos = tile_first_block[tile_of_edge] * tk + local_pos
        src_p[pos], rel_p[pos], dst_p[pos] = src_s, rel_s, dst_s

    # Flat per-core work lists (grouped-matmul pattern), contiguous tile split balanced
    # by block count so the two v7x TensorCores get similar work.
    csum = np.cumsum(blocks_per_tile)
    boundaries = [0]
    for c in range(1, n_cores):
        b = int(np.searchsorted(csum, total_blocks * c / n_cores)) + 1
        b = min(max(b, boundaries[-1] + 1), n_tiles - (n_cores - c))
        boundaries.append(b)
    boundaries.append(n_tiles)

    core_lists, max_steps = [], 1
    for c in range(n_cores):
        tids, blks, fsts, lsts = [], [], [], []
        for i in range(boundaries[c], boundaries[c + 1]):
            nb = int(blocks_per_tile[i])
            for b in range(nb):
                tids.append(i)
                blks.append(int(tile_first_block[i]) + b)
                fsts.append(1 if b == 0 else 0)
                lsts.append(1 if b == nb - 1 else 0)
        core_lists.append((tids, blks, fsts, lsts))
        max_steps = max(max_steps, len(tids))

    tile_id = np.zeros((n_cores, max_steps), np.int32)
    blk_id = np.full((n_cores, max_steps), dummy_block, np.int32)   # padding -> dummy blk
    first = np.zeros((n_cores, max_steps), np.int32)
    last = np.zeros((n_cores, max_steps), np.int32)
    for c, (tids, blks, fsts, lsts) in enumerate(core_lists):
        L = len(tids)
        tile_id[c, :L], blk_id[c, :L] = tids, blks
        first[c, :L], last[c, :L] = fsts, lsts
        tile_id[c, L:] = tids[-1]            # keep x / out block index stable on padding

    # ------- JAX glue: gather + relation scale fused, built directly in compute_dtype,
    # no feature-axis padding (block last dim == full array dim is legal).
    x_cd = nodes_embed.astype(compute_dtype)
    rw_cd = relation_weight.astype(compute_dtype)
    xsrc = x_cd[jnp.asarray(src_p)] * rw_cd[jnp.asarray(rel_p)]      # (E_slab, in_dim)
    dst_2d = jnp.asarray(dst_p).reshape(1, E_slab)
    x_pad = jnp.pad(x_cd, ((0, N_pad - N), (0, 0)))                  # (N_pad, in_dim)
    wt = jnp.asarray(fc_weight).T.astype(compute_dtype)              # (in_dim, out_dim)

    flat = lambda c, t: c * max_steps + t
    grid_spec = pltpu.PrefetchScalarGridSpec(
        num_scalar_prefetch=4,
        grid=(n_cores, max_steps),
        in_specs=[
            pl.BlockSpec((1, tk),
                         lambda c, t, tid, blk, fst, lst: (0, blk[flat(c, t)])),
            pl.BlockSpec((tk, in_dim),
                         lambda c, t, tid, blk, fst, lst: (blk[flat(c, t)], 0)),
            pl.BlockSpec((tm, in_dim),
                         lambda c, t, tid, blk, fst, lst: (tid[flat(c, t)], 0)),
            pl.BlockSpec((in_dim, out_dim),
                         lambda c, t, tid, blk, fst, lst: (0, 0)),
        ],
        out_specs=pl.BlockSpec((tm, out_dim),
                               lambda c, t, tid, blk, fst, lst: (tid[flat(c, t)], 0)),
        scratch_shapes=[pltpu.VMEM((tm, in_dim), jnp.float32),   # f32 accumulator
                        pltpu.VMEM((tm, tk), jnp.int32)],        # hoisted row iota
    )

    out_p = pl.pallas_call(
        _make_kernel(active),
        out_shape=jax.ShapeDtypeStruct((N_pad, out_dim), compute_dtype),
        grid_spec=grid_spec,
        compiler_params=pltpu.CompilerParams(
            dimension_semantics=("parallel", "arbitrary")),
    )(jnp.asarray(tile_id.reshape(-1)), jnp.asarray(blk_id.reshape(-1)),
      jnp.asarray(first.reshape(-1)), jnp.asarray(last.reshape(-1)),
      dst_2d, xsrc, x_pad, wt)

    return out_p[:N]


def wgcn_reference(nodes_embed, edges, fc_weight, relation_weight):
    h = nodes_embed @ fc_weight.T
    msg = (nodes_embed[edges[:, 0]] * relation_weight[edges[:, 1]]) @ fc_weight.T
    agg = jnp.zeros_like(h).at[edges[:, 2]].add(msg)
    return jnp.maximum(h + agg, 0.0)


if __name__ == "__main__":
    # Small deterministic shapes: two node tiles, several edge blocks per tile, and a
    # padding work step on one core are all exercised.
    num_node, num_edge = 200, 1000
    num_relation, input_dim, output_dim = 5, 32, 48

    key = jax.random.PRNGKey(0)
    k1, k2, k3, k4, k5, k6 = jax.random.split(key, 6)

    nodes_embed = jax.random.normal(k1, (num_node, input_dim), dtype=jnp.float32)
    src = jax.random.randint(k2, (num_edge,), 0, num_node, dtype=jnp.int32)
    rel = jax.random.randint(k3, (num_edge,), 0, num_relation, dtype=jnp.int32)
    dst = jax.random.randint(k4, (num_edge,), 0, num_node, dtype=jnp.int32)
    edges = jnp.stack([src, rel, dst], axis=1)                  # (E, 3)

    bound = 1.0 / np.sqrt(input_dim)
    fc_weight = jax.random.uniform(k5, (output_dim, input_dim),
                                   minval=-bound, maxval=bound, dtype=jnp.float32)
    relation_weight = jax.random.uniform(k6, (num_relation, 1), dtype=jnp.float32)

    ref = wgcn_reference(nodes_embed, edges, fc_weight, relation_weight)

    # Exact (f32-operand) path — algebraically identical to the PyTorch module (bias=False).
    out_f32 = wgcn_layer_forward(nodes_embed, edges, fc_weight, relation_weight,
                                 tm=128, tk=256, compute_dtype=jnp.float32)
    out_f32 = jax.block_until_ready(out_f32)
    np.testing.assert_allclose(np.asarray(out_f32.astype(jnp.float32)), np.asarray(ref),
                               rtol=1e-3, atol=1e-3)

    # MXU-rate path (bf16 operands, f32 accumulation, bf16 writeback) — default.
    out_bf16 = wgcn_layer_forward(nodes_embed, edges, fc_weight, relation_weight,
                                  tm=128, tk=256, compute_dtype=jnp.bfloat16)
    out_bf16 = jax.block_until_ready(out_bf16)
    np.testing.assert_allclose(np.asarray(out_bf16.astype(jnp.float32)), np.asarray(ref),
                               rtol=1e-1, atol=1e-1)

    print("KERNEL_OK")
</pallas_src>

<mosaic_0001>
module attributes {stable_mosaic.version = 11 : i64} {
  func.func @kernel(%arg0: i32, %arg1: i32, %arg2: memref<6xi32, #tpu.memory_space<smem>>, %arg3: memref<6xi32, #tpu.memory_space<smem>>, %arg4: memref<6xi32, #tpu.memory_space<smem>>, %arg5: memref<6xi32, #tpu.memory_space<smem>>, %arg6: memref<1x256xi32, #tpu.memory_space<vmem>>, %arg7: memref<256x32xf32, #tpu.memory_space<vmem>>, %arg8: memref<128x32xf32, #tpu.memory_space<vmem>>, %arg9: memref<32x48xf32, #tpu.memory_space<vmem>>, %arg10: memref<128x48xf32, #tpu.memory_space<vmem>>, %arg11: memref<128x32xf32, #tpu.memory_space<vmem>>, %arg12: memref<128x256xi32, #tpu.memory_space<vmem>>) attributes {dimension_semantics = [#tpu.dimension_semantics<parallel>, #tpu.dimension_semantics<arbitrary>], iteration_bounds = array<i64: 2, 3>, scalar_prefetch = 4 : i64, scratch_operands = 2 : i64, tpu.core_type = #tpu.core_type<tc>, window_params = [{transform_indices = @transform_0, window_bounds = array<i64: 1, 256>}, {transform_indices = @transform_1, window_bounds = array<i64: 256, 32>}, {transform_indices = @transform_2, window_bounds = array<i64: 128, 32>}, {pipeline_mode = #tpu.pipeline_mode<synchronous>, transform_indices = @transform_3, window_bounds = array<i64: 32, 48>}, {transform_indices = @transform_4, window_bounds = array<i64: 128, 48>}]} {
    %c3_i32 = arith.constant 3 : i32
    %0 = arith.muli %arg0, %c3_i32 : i32
    %1 = arith.addi %0, %arg1 : i32
    %c0_i32 = arith.constant 0 : i32
    %2 = arith.cmpi eq, %arg1, %c0_i32 : i32
    %3 = arith.extui %2 : i1 to i32
    %c0_i32_0 = arith.constant 0 : i32
    %4 = arith.cmpi ne, %3, %c0_i32_0 : i32
    scf.if %4 {
      %31 = tpu.iota {dimensions = array<i32: 0>} : vector<128x256xi32>
      %c0_13 = arith.constant 0 : index
      %c0_14 = arith.constant 0 : index
      %32 = vector.load %arg12[%c0_13, %c0_14] : memref<128x256xi32, #tpu.memory_space<vmem>>, vector<128x256xi32>
      tpu.vector_store %arg12[%c0_13, %c0_14], %31 {strides = array<i32>} : memref<128x256xi32, #tpu.memory_space<vmem>>, vector<128x256xi32>,
    } else {
    }
    %5 = arith.index_cast %1 : i32 to index
    %6 = memref.load %arg4[%5] : memref<6xi32, #tpu.memory_space<smem>>
    %c1_i32 = arith.constant 1 : i32
    %7 = arith.cmpi eq, %6, %c1_i32 : i32
    %8 = arith.extui %7 : i1 to i32
    %c0_i32_1 = arith.constant 0 : i32
    %9 = arith.cmpi ne, %8, %c0_i32_1 : i32
    scf.if %9 {
      %cst_13 = arith.constant 0.000000e+00 : f32
      %31 = vector.broadcast %cst_13 : f32 to vector<128x32xf32>
      %c0_14 = arith.constant 0 : index
      %c0_15 = arith.constant 0 : index
      %32 = vector.load %arg11[%c0_14, %c0_15] : memref<128x32xf32, #tpu.memory_space<vmem>>, vector<128x32xf32>
      tpu.vector_store %arg11[%c0_14, %c0_15], %31 {strides = array<i32>} : memref<128x32xf32, #tpu.memory_space<vmem>>, vector<128x32xf32>,
    } else {
    }
    %c0 = arith.constant 0 : index
    %c0_2 = arith.constant 0 : index
    %10 = vector.load %arg6[%c0, %c0_2] : memref<1x256xi32, #tpu.memory_space<vmem>>, vector<1x256xi32>
    %11 = arith.index_cast %1 : i32 to index
    %12 = memref.load %arg2[%11] : memref<6xi32, #tpu.memory_space<smem>>
    %c128_i32 = arith.constant 128 : i32
    %13 = arith.muli %12, %c128_i32 : i32
    %14 = vector.broadcast %13 : i32 to vector<1x256xi32>
    %15 = arith.subi %10, %14 : vector<1x256xi32>
    %c0_3 = arith.constant 0 : index
    %c0_4 = arith.constant 0 : index
    %16 = vector.load %arg12[%c0_3, %c0_4] : memref<128x256xi32, #tpu.memory_space<vmem>>, vector<128x256xi32>
    %17 = vector.broadcast %15 : vector<1x256xi32> to vector<128x256xi32>
    %18 = arith.cmpi eq, %16, %17 : vector<128x256xi32>
    %19 = arith.extui %18 : vector<128x256xi1> to vector<128x256xi32>
    %20 = arith.sitofp %19 : vector<128x256xi32> to vector<128x256xf32>
    %c0_5 = arith.constant 0 : index
    %c0_6 = arith.constant 0 : index
    %21 = vector.load %arg11[%c0_5, %c0_6] : memref<128x32xf32, #tpu.memory_space<vmem>>, vector<128x32xf32>
    %c0_7 = arith.constant 0 : index
    %c0_8 = arith.constant 0 : index
    %22 = vector.load %arg7[%c0_7, %c0_8] : memref<256x32xf32, #tpu.memory_space<vmem>>, vector<256x32xf32>
    %cst = arith.constant dense<0.000000e+00> : vector<128x32xf32>
    %23 = tpu.matmul %20, %22, %cst {dimension_numbers = #tpu.dot_dimension_numbers<[1], [0], [0], [1], [0, 0, 1, 1], [], []>} : vector<128x256xf32>, vector<256x32xf32>, vector<128x32xf32> -> vector<128x32xf32>
    %24 = arith.addf %21, %23 : vector<128x32xf32>
    %c0_9 = arith.constant 0 : index
    %c0_10 = arith.constant 0 : index
    %25 = vector.load %arg11[%c0_9, %c0_10] : memref<128x32xf32, #tpu.memory_space<vmem>>, vector<128x32xf32>
    tpu.vector_store %arg11[%c0_9, %c0_10], %24 {strides = array<i32>} : memref<128x32xf32, #tpu.memory_space<vmem>>, vector<128x32xf32>,
    %26 = arith.index_cast %1 : i32 to index
    %27 = memref.load %arg5[%26] : memref<6xi32, #tpu.memory_space<smem>>
    %c1_i32_11 = arith.constant 1 : i32
    %28 = arith.cmpi eq, %27, %c1_i32_11 : i32
    %29 = arith.extui %28 : i1 to i32
    %c0_i32_12 = arith.constant 0 : i32
    %30 = arith.cmpi ne, %29, %c0_i32_12 : i32
    scf.if %30 {
      %c0_13 = arith.constant 0 : index
      %c0_14 = arith.constant 0 : index
      %31 = vector.load %arg8[%c0_13, %c0_14] : memref<128x32xf32, #tpu.memory_space<vmem>>, vector<128x32xf32>
      %c0_15 = arith.constant 0 : index
      %c0_16 = arith.constant 0 : index
      %32 = vector.load %arg11[%c0_15, %c0_16] : memref<128x32xf32, #tpu.memory_space<vmem>>, vector<128x32xf32>
      %33 = arith.addf %31, %32 : vector<128x32xf32>
      %c0_17 = arith.constant 0 : index
      %c0_18 = arith.constant 0 : index
      %34 = vector.load %arg9[%c0_17, %c0_18] : memref<32x48xf32, #tpu.memory_space<vmem>>, vector<32x48xf32>
      %cst_19 = arith.constant dense<0.000000e+00> : vector<128x48xf32>
      %35 = tpu.matmul %33, %34, %cst_19 {dimension_numbers = #tpu.dot_dimension_numbers<[1], [0], [0], [1], [0, 0, 1, 1], [], []>} : vector<128x32xf32>, vector<32x48xf32>, vector<128x48xf32> -> vector<128x48xf32>
      %cst_20 = arith.constant 0.000000e+00 : f32
      %36 = vector.broadcast %cst_20 : f32 to vector<128x48xf32>
      %37 = arith.maximumf %35, %36 : vector<128x48xf32>
      %c0_21 = arith.constant 0 : index
      %c0_22 = arith.constant 0 : index
      %38 = vector.load %arg10[%c0_21, %c0_22] : memref<128x48xf32, #tpu.memory_space<vmem>>, vector<128x48xf32>
      tpu.vector_store %arg10[%c0_21, %c0_22], %37 {strides = array<i32>} : memref<128x48xf32, #tpu.memory_space<vmem>>, vector<128x48xf32>,
    } else {
    }
    return
  }
  func.func @transform_0(%arg0: i32, %arg1: i32, %arg2: memref<6xi32, #tpu.memory_space<smem>>, %arg3: memref<6xi32, #tpu.memory_space<smem>>, %arg4: memref<6xi32, #tpu.memory_space<smem>>, %arg5: memref<6xi32, #tpu.memory_space<smem>>) -> (i32, i32) {
    %c3_i32 = arith.constant 3 : i32
    %0 = arith.muli %arg0, %c3_i32 : i32
    %1 = arith.addi %0, %arg1 : i32
    %2 = arith.index_cast %1 : i32 to index
    %3 = memref.load %arg3[%2] : memref<6xi32, #tpu.memory_space<smem>>
    %c0_i32 = arith.constant 0 : i32
    %c0_i32_0 = arith.constant 0 : i32
    return %c0_i32, %3 : i32, i32
  }
  func.func @transform_1(%arg0: i32, %arg1: i32, %arg2: memref<6xi32, #tpu.memory_space<smem>>, %arg3: memref<6xi32, #tpu.memory_space<smem>>, %arg4: memref<6xi32, #tpu.memory_space<smem>>, %arg5: memref<6xi32, #tpu.memory_space<smem>>) -> (i32, i32) {
    %c3_i32 = arith.constant 3 : i32
    %0 = arith.muli %arg0, %c3_i32 : i32
    %1 = arith.addi %0, %arg1 : i32
    %2 = arith.index_cast %1 : i32 to index
    %3 = memref.load %arg3[%2] : memref<6xi32, #tpu.memory_space<smem>>
    %c0_i32 = arith.constant 0 : i32
    %c0_i32_0 = arith.constant 0 : i32
    return %3, %c0_i32 : i32, i32
  }
  func.func @transform_2(%arg0: i32, %arg1: i32, %arg2: memref<6xi32, #tpu.memory_space<smem>>, %arg3: memref<6xi32, #tpu.memory_space<smem>>, %arg4: memref<6xi32, #tpu.memory_space<smem>>, %arg5: memref<6xi32, #tpu.memory_space<smem>>) -> (i32, i32) {
    %c3_i32 = arith.constant 3 : i32
    %0 = arith.muli %arg0, %c3_i32 : i32
    %1 = arith.addi %0, %arg1 : i32
    %2 = arith.index_cast %1 : i32 to index
    %3 = memref.load %arg2[%2] : memref<6xi32, #tpu.memory_space<smem>>
    %c0_i32 = arith.constant 0 : i32
    %c0_i32_0 = arith.constant 0 : i32
    return %3, %c0_i32 : i32, i32
  }
  func.func @transform_3(%arg0: i32, %arg1: i32, %arg2: memref<6xi32, #tpu.memory_space<smem>>, %arg3: memref<6xi32, #tpu.memory_space<smem>>, %arg4: memref<6xi32, #tpu.memory_space<smem>>, %arg5: memref<6xi32, #tpu.memory_space<smem>>) -> (i32, i32) {
    %c0_i32 = arith.constant 0 : i32
    %c0_i32_0 = arith.constant 0 : i32
    %c0_i32_1 = arith.constant 0 : i32
    return %c0_i32, %c0_i32_0 : i32, i32
  }
  func.func @transform_4(%arg0: i32, %arg1: i32, %arg2: memref<6xi32, #tpu.memory_space<smem>>, %arg3: memref<6xi32, #tpu.memory_space<smem>>, %arg4: memref<6xi32, #tpu.memory_space<smem>>, %arg5: memref<6xi32, #tpu.memory_space<smem>>) -> (i32, i32) {
    %c3_i32 = arith.constant 3 : i32
    %0 = arith.muli %arg0, %c3_i32 : i32
    %1 = arith.addi %0, %arg1 : i32
    %2 = arith.index_cast %1 : i32 to index
    %3 = memref.load %arg2[%2] : memref<6xi32, #tpu.memory_space<smem>>
    %c0_i32 = arith.constant 0 : i32
    %c0_i32_0 = arith.constant 0 : i32
    return %3, %c0_i32 : i32, i32
  }
}

</mosaic_0001>

<llo_original>
// kernel: tpu_custom_call.1
$region0: #{tpu_custom_call.1}
  #allocation0 [shape = 'u32[]', space=smem, size = 0x4, offset = 0x4, fixed_abs, tag = 'smem constant byte address 0x4 - core index']
  #allocation1 [shape = 'u32[144,128]{1,0:T(1,128)}', space=vmem, size = 0x12000, scoped, tag = 'internal scratch']
  #allocation2 [shape = 'f32[128,32]{1,0:T(8,128)}', space=vmem, size = 0x10000, scoped, tag = 'scratch operand']
  #allocation3 [shape = 's32[128,256]{1,0:T(8,128)}', space=vmem, size = 0x20000, scoped, tag = 'scratch operand']
  #allocation4 [shape = 's32[1]{0}', space=sflag, size = 0x4, scoped, tag = 'scoped memory for tpu_custom_call.1']
  #allocation5 [shape = 'u8[512]{0}', space=smem, size = 0x200, scoped, tag = 'prefetched SMEM operand 0']
  #allocation6 [shape = 'u8[512]{0}', space=smem, size = 0x200, scoped, tag = 'prefetched SMEM operand 1']
  #allocation7 [shape = 'u8[512]{0}', space=smem, size = 0x200, scoped, tag = 'prefetched SMEM operand 2']
  #allocation8 [shape = 'u8[512]{0}', space=smem, size = 0x200, scoped, tag = 'prefetched SMEM operand 3']
  %s0 = inlined_call_operand.vmem [shape: s32[6], index: 0, kind: input, shape index: {}]
  %s1 = inlined_call_operand.vmem [shape: s32[6], index: 1, kind: input, shape index: {}]
  %s2 = inlined_call_operand.vmem [shape: s32[6], index: 2, kind: input, shape index: {}]
  %s3 = inlined_call_operand.vmem [shape: s32[6], index: 3, kind: input, shape index: {}]
  %s4 = inlined_call_operand.vmem [shape: s32[1,1536], index: 4, kind: input, shape index: {}]
  %s5 = inlined_call_operand.vmem [shape: f32[1536,32], index: 5, kind: input, shape index: {}]
  %s6 = inlined_call_operand.vmem [shape: f32[256,32], index: 6, kind: input, shape index: {}]
  %s7 = inlined_call_operand.vmem [shape: f32[32,48], index: 7, kind: input, shape index: {}]
  %s8 = inlined_call_operand.vmem [shape: f32[256,48], index: 8, kind: output, shape index: {}]
  %s9 = sld [smem:[#allocation0]]
  $region61: #{tpu_custom_call.1} parent=0
    _
  %s11 = ssub.s32 1, %s9
  %s12 = scalar_select 0, %s11, %s9
  %s13 = sshll.u32 %s0, 4
  %s14 = int_to_ptr.vmem [resolvable:$true] %s13
  %16 = dma.vmem_to_smem %s14, 16, [#allocation5], [#allocation4]
  %s17 = sshll.u32 %s1, 4
  %s18 = int_to_ptr.vmem [resolvable:$true] %s17
  %20 = dma.vmem_to_smem %s18, 16, [#allocation6], [#allocation4]
  %s21 = sshll.u32 %s2, 4
  %s22 = int_to_ptr.vmem [resolvable:$true] %s21
  %24 = dma.vmem_to_smem %s22, 16, [#allocation7], [#allocation4]
  %s25 = sshll.u32 %s3, 4
  %s26 = int_to_ptr.vmem [resolvable:$true] %s25
  %28 = dma.vmem_to_smem %s26, 16, [#allocation8], [#allocation4]
  %29 = dma.done [#allocation4], 64
  %30 = sfence
  loop: start=0, step=1, limit=8
  $region2: #{tpu_custom_call.1} parent=0 // loop_pre_header
    _
  $region3: #{tpu_custom_call.1} parent=0 // loop_header
    %s32 = sphi 0, %s36
    %p33 = scmp.ge.s32.totalorder %s32, 8
    %s39 = sphi 0, %s51
    %s40 = sphi 0, %s47
    %s41 = sphi 0, %s39
    %s42 = sphi 0, %s40
    %s43 = sphi 0, %s41
    %s44 = sphi 0, %s42
    %s60 = sphi 0, %s62
    %s63 = sphi 0, %s60
    %s64 = sphi 0, %s63
    %s80 = sphi 0, %s64
    %s92 = sphi 0, %s94
    %s95 = sphi 0, %s92
    %s96 = sphi 0, %s95
    %s112 = sphi 0, %s96
    %s124 = sphi 0, %s126
    %s127 = sphi 0, %s124
    %s128 = sphi 0, %s127
    %s144 = sphi 0, %s128
    %s148 = sphi 0, %s148
    %s150 = sphi 0, %s148
    %s151 = sphi 0, %s150
    %s165 = sphi 0, %s151
    %s177 = sphi 0, %s179
    %s180 = sphi 0, %s177
    %s181 = sphi 0, %s180
    %s197 = sphi 0, %s181
  $region4: #{tpu_custom_call.1} parent=0 // loop_header_branch
    %35 = sbr.rel (%p33) target = $region8
  $region5: #{tpu_custom_call.1} parent=0 // loop_body
    %s37 = ssub.s32 %s32, 1
    %s38 = ssub.s32 %s32, 2
    %s45 = sadd.s32 1, %s40
    %p46 = scmp.ge.s32.totalorder %s45, 3
    %s47 = scalar_select %p46, 0, %s45
    %s48 = sadd.s32 1, %s39
    %s49 = scalar_select %p46, %s48, %s39
    %p50 = scmp.ge.s32.totalorder %s49, 2
    %s51 = scalar_select %p50, 0, %s49
    %s52 = smul.u32 %s39, 3
    %s53 = sadd.s32 %s52, %s40
    %s54 = sld [smem:[#allocation6 + %s53]]
    %s55 = smul.u32 %s51, 3
    %s56 = sadd.s32 %s55, %s47
    %s57 = sld [smem:[#allocation6 + %s56]]
    %s58 = ssub.s32 %s54, %s57
    %p59 = scmp.eq.s32.totalorder %s58, 0
    %s61 = sadd.s32 %s60, 1
    %s62 = scalar_select %p59, %s60, %s61
    %p65 = pneg %p59
    %p66 = scmp.eq.s32.totalorder %s32, 5
    %p67 = por %p65, %p66
    %p68 = scmp.ne.s32.totalorder %s60, %s63
    %p69 = scmp.eq.s32.totalorder %s32, 0
    %p70 = por %p68, %p69
    %p71 = scmp.ne.s32.totalorder %s60, %s63
    %p72 = scmp.eq.s32.totalorder %s37, 5
    %p73 = por %p71, %p72
    %p74 = scmp.ne.s32.totalorder %s63, %s64
    %p75 = scmp.eq.s32.totalorder %s37, 0
    %p76 = por %p74, %p75
    %p77 = scmp.ne.s32.totalorder %s63, %s64
    %p78 = scmp.eq.s32.totalorder %s38, 5
    %p79 = por %p77, %p78
    %p81 = scmp.ne.s32.totalorder %s64, %s80
    %p82 = scmp.eq.s32.totalorder %s38, 0
    %p83 = por %p81, %p82
    %s84 = smul.u32 %s39, 3
    %s85 = sadd.s32 %s84, %s40
    %s86 = sld [smem:[#allocation6 + %s85]]
    %s87 = smul.u32 %s51, 3
    %s88 = sadd.s32 %s87, %s47
    %s89 = sld [smem:[#allocation6 + %s88]]
    %s90 = ssub.s32 %s86, %s89
    %p91 = scmp.eq.s32.totalorder %s90, 0
    %s93 = sadd.s32 %s92, 1
    %s94 = scalar_select %p91, %s92, %s93
    %p97 = pneg %p91
    %p98 = scmp.eq.s32.totalorder %s32, 5
    %p99 = por %p97, %p98
    %p100 = scmp.ne.s32.totalorder %s92, %s95
    %p101 = scmp.eq.s32.totalorder %s32, 0
    %p102 = por %p100, %p101
    %p103 = scmp.ne.s32.totalorder %s92, %s95
    %p104 = scmp.eq.s32.totalorder %s37, 5
    %p105 = por %p103, %p104
    %p106 = scmp.ne.s32.totalorder %s95, %s96
    %p107 = scmp.eq.s32.totalorder %s37, 0
    %p108 = por %p106, %p107
    %p109 = scmp.ne.s32.totalorder %s95, %s96
    %p110 = scmp.eq.s32.totalorder %s38, 5
    %p111 = por %p109, %p110
    %p113 = scmp.ne.s32.totalorder %s96, %s112
    %p114 = scmp.eq.s32.totalorder %s38, 0
    %p115 = por %p113, %p114
    %s116 = smul.u32 %s39, 3
    %s117 = sadd.s32 %s116, %s40
    %s118 = sld [smem:[#allocation5 + %s117]]
    %s119 = smul.u32 %s51, 3
    %s120 = sadd.s32 %s119, %s47
    %s121 = sld [smem:[#allocation5 + %s120]]
    %s122 = ssub.s32 %s118, %s121
    %p123 = scmp.eq.s32.totalorder %s122, 0
    %s125 = sadd.s32 %s124, 1
    %s126 = scalar_select %p123, %s124, %s125
    %p129 = pneg %p123
    %p130 = scmp.eq.s32.totalorder %s32, 5
    %p131 = por %p129, %p130
    %p132 = scmp.ne.s32.totalorder %s124, %s127
    %p133 = scmp.eq.s32.totalorder %s32, 0
    %p134 = por %p132, %p133
    %p135 = scmp.ne.s32.totalorder %s124, %s127
    %p136 = scmp.eq.s32.totalorder %s37, 5
    %p137 = por %p135, %p136
    %p138 = scmp.ne.s32.totalorder %s127, %s128
    %p139 = scmp.eq.s32.totalorder %s37, 0
    %p140 = por %p138, %p139
    %p141 = scmp.ne.s32.totalorder %s127, %s128
    %p142 = scmp.eq.s32.totalorder %s38, 5
    %p143 = por %p141, %p142
    %p145 = scmp.ne.s32.totalorder %s128, %s144
    %p146 = scmp.eq.s32.totalorder %s38, 0
    %p147 = por %p145, %p146
    %s149 = sadd.s32 %s148, 1
    %p152 = scmp.eq.s32.totalorder %s32, 5
    %p153 = scmp.ne.s32.totalorder %s148, %s150
    %p154 = scmp.eq.s32.totalorder %s32, 0
    %p155 = por %p153, %p154
    %p156 = scmp.ne.s32.totalorder %s148, %s150
    %p157 = scmp.eq.s32.totalorder %s37, 5
    %p158 = por %p156, %p157
    %p159 = scmp.ne.s32.totalorder %s150, %s151
    %p160 = scmp.eq.s32.totalorder %s37, 0
    %p161 = por %p159, %p160
    %p162 = scmp.ne.s32.totalorder %s150, %s151
    %p163 = scmp.eq.s32.totalorder %s38, 5
    %p164 = por %p162, %p163
    %p166 = scmp.ne.s32.totalorder %s151, %s165
    %p167 = scmp.eq.s32.totalorder %s38, 0
    %p168 = por %p166, %p167
    %s169 = smul.u32 %s39, 3
    %s170 = sadd.s32 %s169, %s40
    %s171 = sld [smem:[#allocation5 + %s170]]
    %s172 = smul.u32 %s51, 3
    %s173 = sadd.s32 %s172, %s47
    %s174 = sld [smem:[#allocation5 + %s173]]
    %s175 = ssub.s32 %s171, %s174
    %p176 = scmp.eq.s32.totalorder %s175, 0
    %s178 = sadd.s32 %s177, 1
    %s179 = scalar_select %p176, %s177, %s178
    %p182 = pneg %p176
    %p183 = scmp.eq.s32.totalorder %s32, 5
    %p184 = por %p182, %p183
    %p185 = scmp.ne.s32.totalorder %s177, %s180
    %p186 = scmp.eq.s32.totalorder %s32, 0
    %p187 = por %p185, %p186
    %p188 = scmp.ne.s32.totalorder %s177, %s180
    %p189 = scmp.eq.s32.totalorder %s37, 5
    %p190 = por %p188, %p189
    %p191 = scmp.ne.s32.totalorder %s180, %s181
    %p192 = scmp.eq.s32.totalorder %s37, 0
    %p193 = por %p191, %p192
    %p194 = scmp.ne.s32.totalorder %s180, %s181
    %p195 = scmp.eq.s32.totalorder %s38, 5
    %p196 = por %p194, %p195
    %p198 = scmp.ne.s32.totalorder %s181, %s197
    %p199 = scmp.eq.s32.totalorder %s38, 0
    %p200 = por %p198, %p199
    %p201 = scmp.le.s32.totalorder 1, %s32
    %p202 = scmp.lt.s32.totalorder %s32, 7
    %p203 = pnand %p201, %p202
    %p204 = pneg %p203
    // Predicated region
    $region9: #{tpu_custom_call.1} parent=5 // pred_check
      _
    $region10: #{tpu_custom_call.1} parent=5 // pred_check_branch
      %206 = sbr.rel (%p203) target = $region12
    $region11: #{tpu_custom_call.1} parent=5 // pred_region
      %s207 = ssub.s32 %s32, 1
      // Predicated region
      $region13: #{tpu_custom_call.1} parent=11 // pred_check
        %p208 = pneg %p161
      $region14: #{tpu_custom_call.1} parent=11 // pred_check_branch
        %210 = sbr.rel (%p208) target = $region16
      $region15: #{tpu_custom_call.1} parent=11 // pred_region
        _
      $region16: #{tpu_custom_call.1} parent=11 // pred_fallthru
        _
    $region12: #{tpu_custom_call.1} parent=5 // pred_fallthru
      _
    %p211 = scmp.lt.s32.totalorder %s32, 6
    // Predicated region
    $region17: #{tpu_custom_call.1} parent=5 // pred_check
      %p212 = pneg %p211
    $region18: #{tpu_custom_call.1} parent=5 // pred_check_branch
      %214 = sbr.rel (%p212) target = $region20
    $region19: #{tpu_custom_call.1} parent=5 // pred_region
      // Predicated region
      $region21: #{tpu_custom_call.1} parent=19 // pred_check
        %p215 = pneg %p70
      $region22: #{tpu_custom_call.1} parent=19 // pred_check_branch
        %217 = sbr.rel (%p215) target = $region24
      $region23: #{tpu_custom_call.1} parent=19 // pred_region
        %s218 = smul.u32 %s39, 3
        %s219 = sadd.s32 %s218, %s40
        %s220 = sld [smem:[#allocation6 + %s219]]
        %s221 = smul.u32 2, %s220
        %p222 = scmp.lt.s32.totalorder %s221, 11
        %s223 = scalar_select %p222, %s221, 11
        %s224 = scalar_lea.vmem %s4, %s223
        %s225 = smul.u32 %s39, 3
        %s226 = sadd.s32 %s225, %s40
        %s227 = sld [smem:[#allocation6 + %s226]]
        %s228 = smul.u32 2, %s227
      $region24: #{tpu_custom_call.1} parent=19 // pred_fallthru
        _
      // Predicated region
      $region25: #{tpu_custom_call.1} parent=19 // pred_check
        %p229 = pneg %p102
      $region26: #{tpu_custom_call.1} parent=19 // pred_check_branch
        %231 = sbr.rel (%p229) target = $region28
      $region27: #{tpu_custom_call.1} parent=19 // pred_region
        %s232 = smul.u32 %s39, 3
        %s233 = sadd.s32 %s232, %s40
        %s234 = sld [smem:[#allocation6 + %s233]]
        %s235 = smul.u32 32, %s234
        %p236 = scmp.lt.s32.totalorder %s235, 191
        %s237 = scalar_select %p236, %s235, 191
        %s238 = smul.addr %s237, 8
        %s239 = scalar_lea.vmem %s5, %s238
        %s240 = smul.u32 %s39, 3
        %s241 = sadd.s32 %s240, %s40
        %s242 = sld [smem:[#allocation6 + %s241]]
        %s243 = smul.u32 32, %s242
      $region28: #{tpu_custom_call.1} parent=19 // pred_fallthru
        _
      // Predicated region
      $region29: #{tpu_custom_call.1} parent=19 // pred_check
        %p244 = pneg %p134
      $region30: #{tpu_custom_call.1} parent=19 // pred_check_branch
        %246 = sbr.rel (%p244) target = $region32
      $region31: #{tpu_custom_call.1} parent=19 // pred_region
        %s247 = smul.u32 %s39, 3
        %s248 = sadd.s32 %s247, %s40
        %s249 = sld [smem:[#allocation5 + %s248]]
        %s250 = smul.u32 16, %s249
        %p251 = scmp.lt.s32.totalorder %s250, 31
        %s252 = scalar_select %p251, %s250, 31
        %s253 = smul.addr %s252, 8
        %s254 = scalar_lea.vmem %s6, %s253
        %s255 = smul.u32 %s39, 3
        %s256 = sadd.s32 %s255, %s40
        %s257 = sld [smem:[#allocation5 + %s256]]
        %s258 = smul.u32 16, %s257
      $region32: #{tpu_custom_call.1} parent=19 // pred_fallthru
        _
    $region20: #{tpu_custom_call.1} parent=5 // pred_fallthru
      _
    %p259 = scmp.le.s32.totalorder 1, %s32
    %p260 = scmp.lt.s32.totalorder %s32, 7
    %p261 = pnand %p259, %p260
    %p262 = pneg %p261
    // Predicated region
    $region33: #{tpu_custom_call.1} parent=5 // pred_check
      _
    $region34: #{tpu_custom_call.1} parent=5 // pred_check_branch
      %264 = sbr.rel (%p261) target = $region36
    $region35: #{tpu_custom_call.1} parent=5 // pred_region
      %s265 = ssub.s32 %s32, 1
      %s266 = smul.u32 %s41, 3
      %s267 = sadd.s32 %s266, %s42
      %s268 = sld [smem:[#allocation6 + %s267]]
      %s269 = smul.u32 2, %s268
      %p270 = scmp.lt.s32.totalorder %s269, 11
      %s271 = scalar_select %p270, %s269, 11
      %s272 = scalar_lea.vmem %s4, %s271
      %p273 = pneg %p76
      %p274 = pneg %p73
      %s275 = smul.u32 %s41, 3
      %s276 = sadd.s32 %s275, %s42
      %s277 = sld [smem:[#allocation6 + %s276]]
      %s278 = smul.u32 32, %s277
      %p279 = scmp.lt.s32.totalorder %s278, 191
      %s280 = scalar_select %p279, %s278, 191
      %s281 = smul.addr %s280, 8
      %s282 = scalar_lea.vmem %s5, %s281
      %p283 = pneg %p108
      %p284 = pneg %p105
      %s285 = smul.u32 %s41, 3
      %s286 = sadd.s32 %s285, %s42
      %s287 = sld [smem:[#allocation5 + %s286]]
      %s288 = smul.u32 16, %s287
      %p289 = scmp.lt.s32.totalorder %s288, 31
      %s290 = scalar_select %p289, %s288, 31
      %s291 = smul.addr %s290, 8
      %s292 = scalar_lea.vmem %s6, %s291
      %p293 = pneg %p140
      %p294 = pneg %p137
      %p295 = pneg %p161
      %p296 = pneg %p158
      %p297 = pneg %p193
      %p298 = pneg %p190
      %s299 = smul.u32 %s41, 3
      %s300 = sadd.s32 %s299, %s42
      %s301 = sld [smem:[#allocation5 + %s300]]
      %s302 = smul.u32 16, %s301
      %p303 = scmp.lt.s32.totalorder %s302, 31
      %s304 = scalar_select %p303, %s302, 31
      %s305 = smul.addr %s304, 8
      %s306 = scalar_lea.vmem %s8, %s305
      %s307 = smul.u32 %s41, 3
      %s308 = sadd.s32 %s307, %s42
      %s309 = sld [smem:[#allocation6 + %s308]]
      %s310 = smul.u32 2, %s309
      %p311 = scmp.lt.s32.totalorder %s310, 11
      %s312 = scalar_select %p311, %s310, 11
      %s313 = scalar_lea.vmem %s4, %s312
      %s314 = smul.u32 %s41, 3
      %s315 = sadd.s32 %s314, %s42
      %s316 = sld [smem:[#allocation6 + %s315]]
      %s317 = smul.u32 2, %s316
      %s318 = smul.u32 %s41, 3
      %s319 = sadd.s32 %s318, %s42
      %s320 = sld [smem:[#allocation6 + %s319]]
      %s321 = smul.u32 32, %s320
      %p322 = scmp.lt.s32.totalorder %s321, 191
      %s323 = scalar_select %p322, %s321, 191
      %s324 = smul.addr %s323, 8
      %s325 = scalar_lea.vmem %s5, %s324
      %s326 = smul.u32 %s41, 3
      %s327 = sadd.s32 %s326, %s42
      %s328 = sld [smem:[#allocation6 + %s327]]
      %s329 = smul.u32 32, %s328
      %s330 = smul.u32 %s41, 3
      %s331 = sadd.s32 %s330, %s42
      %s332 = sld [smem:[#allocation5 + %s331]]
      %s333 = smul.u32 16, %s332
      %p334 = scmp.lt.s32.totalorder %s333, 31
      %s335 = scalar_select %p334, %s333, 31
      %s336 = smul.addr %s335, 8
      %s337 = scalar_lea.vmem %s6, %s336
      %s338 = smul.u32 %s41, 3
      %s339 = sadd.s32 %s338, %s42
      %s340 = sld [smem:[#allocation5 + %s339]]
      %s341 = smul.u32 16, %s340
      %s342 = smul.u32 %s41, 3
      %s343 = sadd.s32 %s342, %s42
      %s344 = sld [smem:[#allocation5 + %s343]]
      %s345 = smul.u32 16, %s344
      %p346 = scmp.lt.s32.totalorder %s345, 31
      %s347 = scalar_select %p346, %s345, 31
      %s348 = smul.addr %s347, 8
      %s349 = scalar_lea.vmem %s8, %s348
      %s350 = smul.u32 %s41, 3
      %s351 = sadd.s32 %s350, %s42
      %s352 = sld [smem:[#allocation5 + %s351]]
      %s353 = smul.u32 16, %s352
      %s354 = smul.u32 %s41, 3
      %s355 = sadd.s32 %s354, %s42
      %p356 = scmp.eq.s32.totalorder %s42, 0
      // Predicated region
      $region37: #{tpu_custom_call.1} parent=35 // pred_check
        %p357 = pneg %p356
      $region38: #{tpu_custom_call.1} parent=35 // pred_check_branch
        %359 = sbr.rel (%p357) target = $region40
      $region39: #{tpu_custom_call.1} parent=35 // pred_region
        %v360 = vlaneseq
        %v361 = vshrl.u32 %v360, 7
        %v362 = vadd.s32 %v361, 8
        %v363 = vadd.s32 %v361, 16
        %v364 = vadd.s32 %v361, 24
        %v365 = vadd.s32 %v361, 32
        %v366 = vadd.s32 %v361, 40
        %v367 = vadd.s32 %v361, 48
        %v368 = vadd.s32 %v361, 56
        %v369 = vadd.s32 %v361, 64
        %v370 = vadd.s32 %v361, 72
        %v371 = vadd.s32 %v361, 80
        %v372 = vadd.s32 %v361, 88
        %v373 = vadd.s32 %v361, 96
        %v374 = vadd.s32 %v361, 104
        %v375 = vadd.s32 %v361, 112
        %v376 = vadd.s32 %v361, 120
        %377 = vst [vmem:[#allocation3] sm:$0xff] %v361
        %378 = vst [vmem:[#allocation3 + $0x8] sm:$0xff] %v361
        %379 = vst [vmem:[#allocation3 + $0x10] sm:$0xff] %v362
        %380 = vst [vmem:[#allocation3 + $0x18] sm:$0xff] %v362
        %381 = vst [vmem:[#allocation3 + $0x20] sm:$0xff] %v363
        %382 = vst [vmem:[#allocation3 + $0x28] sm:$0xff] %v363
        %383 = vst [vmem:[#allocation3 + $0x30] sm:$0xff] %v364
        %384 = vst [vmem:[#allocation3 + $0x38] sm:$0xff] %v364
        %385 = vst [vmem:[#allocation3 + $0x40] sm:$0xff] %v365
        %386 = vst [vmem:[#allocation3 + $0x48] sm:$0xff] %v365
        %387 = vst [vmem:[#allocation3 + $0x50] sm:$0xff] %v366
        %388 = vst [vmem:[#allocation3 + $0x58] sm:$0xff] %v366
        %389 = vst [vmem:[#allocation3 + $0x60] sm:$0xff] %v367
        %390 = vst [vmem:[#allocation3 + $0x68] sm:$0xff] %v367
        %391 = vst [vmem:[#allocation3 + $0x70] sm:$0xff] %v368
        %392 = vst [vmem:[#allocation3 + $0x78] sm:$0xff] %v368
        %393 = vst [vmem:[#allocation3 + $0x80] sm:$0xff] %v369
        %394 = vst [vmem:[#allocation3 + $0x88] sm:$0xff] %v369
        %395 = vst [vmem:[#allocation3 + $0x90] sm:$0xff] %v370
        %396 = vst [vmem:[#allocation3 + $0x98] sm:$0xff] %v370
        %397 = vst [vmem:[#allocation3 + $0xa0] sm:$0xff] %v371
        %398 = vst [vmem:[#allocation3 + $0xa8] sm:$0xff] %v371
        %399 = vst [vmem:[#allocation3 + $0xb0] sm:$0xff] %v372
        %400 = vst [vmem:[#allocation3 + $0xb8] sm:$0xff] %v372
        %401 = vst [vmem:[#allocation3 + $0xc0] sm:$0xff] %v373
        %402 = vst [vmem:[#allocation3 + $0xc8] sm:$0xff] %v373
        %403 = vst [vmem:[#allocation3 + $0xd0] sm:$0xff] %v374
        %404 = vst [vmem:[#allocation3 + $0xd8] sm:$0xff] %v374
        %405 = vst [vmem:[#allocation3 + $0xe0] sm:$0xff] %v375
        %406 = vst [vmem:[#allocation3 + $0xe8] sm:$0xff] %v375
        %407 = vst [vmem:[#allocation3 + $0xf0] sm:$0xff] %v376
        %408 = vst [vmem:[#allocation3 + $0xf8] sm:$0xff] %v376
      $region40: #{tpu_custom_call.1} parent=35 // pred_fallthru
        _
      %s409 = sld [smem:[#allocation7 + %s355]]
      %p410 = scmp.eq.s32.totalorder %s409, 1
      // Predicated region
      $region41: #{tpu_custom_call.1} parent=35 // pred_check
        %p411 = pneg %p410
      $region42: #{tpu_custom_call.1} parent=35 // pred_check_branch
        %413 = sbr.rel (%p411) target = $region44
      $region43: #{tpu_custom_call.1} parent=35 // pred_region
        %vm414 = vcmask 261120
        %415 = vst.msk [vmem:[#allocation2] sm:$0xff] %vm414, 0.0
        %416 = vst.msk [vmem:[#allocation2 + $0x8] sm:$0xff] %vm414, 0.0
        %417 = vst.msk [vmem:[#allocation2 + $0x10] sm:$0xff] %vm414, 0.0
        %418 = vst.msk [vmem:[#allocation2 + $0x18] sm:$0xff] %vm414, 0.0
        %419 = vst.msk [vmem:[#allocation2 + $0x20] sm:$0xff] %vm414, 0.0
        %420 = vst.msk [vmem:[#allocation2 + $0x28] sm:$0xff] %vm414, 0.0
        %421 = vst.msk [vmem:[#allocation2 + $0x30] sm:$0xff] %vm414, 0.0
        %422 = vst.msk [vmem:[#allocation2 + $0x38] sm:$0xff] %vm414, 0.0
        %423 = vst.msk [vmem:[#allocation2 + $0x40] sm:$0xff] %vm414, 0.0
        %424 = vst.msk [vmem:[#allocation2 + $0x48] sm:$0xff] %vm414, 0.0
        %425 = vst.msk [vmem:[#allocation2 + $0x50] sm:$0xff] %vm414, 0.0
        %426 = vst.msk [vmem:[#allocation2 + $0x58] sm:$0xff] %vm414, 0.0
        %427 = vst.msk [vmem:[#allocation2 + $0x60] sm:$0xff] %vm414, 0.0
        %428 = vst.msk [vmem:[#allocation2 + $0x68] sm:$0xff] %vm414, 0.0
        %429 = vst.msk [vmem:[#allocation2 + $0x70] sm:$0xff] %vm414, 0.0
        %430 = vst.msk [vmem:[#allocation2 + $0x78] sm:$0xff] %vm414, 0.0
      $region44: #{tpu_custom_call.1} parent=35 // pred_fallthru
        _
      %v431 = vld [vmem:[%s313] sm:$0x3]
      %s432 = sld [smem:[#allocation5 + %s355]]
      %s433 = smul.u32 %s432, 128
      %v434 = vstv %s433
      %v435 = vsub.s32 %v431, %v434
      %v436 = vld [vmem:[#allocation3] sm:$0xff]
      %v437 = vld [vmem:[#allocation3 + $0x8] sm:$0xff]
      %v438 = vld [vmem:[#allocation3 + $0x10] sm:$0xff]
      %v439 = vld [vmem:[#allocation3 + $0x18] sm:$0xff]
      %v440 = vld [vmem:[#allocation3 + $0x20] sm:$0xff]
      %v441 = vld [vmem:[#allocation3 + $0x28] sm:$0xff]
      %v442 = vld [vmem:[#allocation3 + $0x30] sm:$0xff]
      %v443 = vld [vmem:[#allocation3 + $0x38] sm:$0xff]
      %v444 = vld [vmem:[#allocation3 + $0x40] sm:$0xff]
      %v445 = vld [vmem:[#allocation3 + $0x48] sm:$0xff]
      %v446 = vld [vmem:[#allocation3 + $0x50] sm:$0xff]
      %v447 = vld [vmem:[#allocation3 + $0x58] sm:$0xff]
      %v448 = vld [vmem:[#allocation3 + $0x60] sm:$0xff]
      %v449 = vld [vmem:[#allocation3 + $0x68] sm:$0xff]
      %v450 = vld [vmem:[#allocation3 + $0x70] sm:$0xff]
      %v451 = vld [vmem:[#allocation3 + $0x78] sm:$0xff]
      %v452 = vld [vmem:[#allocation3 + $0x80] sm:$0xff]
      %v453 = vld [vmem:[#allocation3 + $0x88] sm:$0xff]
      %v454 = vld [vmem:[#allocation3 + $0x90] sm:$0xff]
      %v455 = vld [vmem:[#allocation3 + $0x98] sm:$0xff]
      %v456 = vld [vmem:[#allocation3 + $0xa0] sm:$0xff]
      %v457 = vld [vmem:[#allocation3 + $0xa8] sm:$0xff]
      %v458 = vld [vmem:[#allocation3 + $0xb0] sm:$0xff]
      %v459 = vld [vmem:[#allocation3 + $0xb8] sm:$0xff]
      %v460 = vld [vmem:[#allocation3 + $0xc0] sm:$0xff]
      %v461 = vld [vmem:[#allocation3 + $0xc8] sm:$0xff]
      %v462 = vld [vmem:[#allocation3 + $0xd0] sm:$0xff]
      %v463 = vld [vmem:[#allocation3 + $0xd8] sm:$0xff]
      %v464 = vld [vmem:[#allocation3 + $0xe0] sm:$0xff]
      %v465 = vld [vmem:[#allocation3 + $0xe8] sm:$0xff]
      %v466 = vld [vmem:[#allocation3 + $0xf0] sm:$0xff]
      %v467 = vld [vmem:[#allocation3 + $0xf8] sm:$0xff]
      %v468 = vlaneseq
      %v469 = vshrl.u32 %v468, 7
      %v470 = vsub.s32 0, %v469
      %v471 = vrot.slane %v435, %v470
      %v472 = vlaneseq
      %v473 = vshrl.u32 %v472, 7
      %v474 = vsub.s32 1, %v473
      %v475 = vrot.slane %v435, %v474
      %vm476 = vcmp.eq.s32.totalorder %v436, %v471
      %vm477 = vcmp.eq.s32.totalorder %v437, %v475
      %vm478 = vcmp.eq.s32.totalorder %v438, %v471
      %vm479 = vcmp.eq.s32.totalorder %v439, %v475
      %vm480 = vcmp.eq.s32.totalorder %v440, %v471
      %vm481 = vcmp.eq.s32.totalorder %v441, %v475
      %vm482 = vcmp.eq.s32.totalorder %v442, %v471
      %vm483 = vcmp.eq.s32.totalorder %v443, %v475
      %vm484 = vcmp.eq.s32.totalorder %v444, %v471
      %vm485 = vcmp.eq.s32.totalorder %v445, %v475
      %vm486 = vcmp.eq.s32.totalorder %v446, %v471
      %vm487 = vcmp.eq.s32.totalorder %v447, %v475
      %vm488 = vcmp.eq.s32.totalorder %v448, %v471
      %vm489 = vcmp.eq.s32.totalorder %v449, %v475
      %vm490 = vcmp.eq.s32.totalorder %v450, %v471
      %vm491 = vcmp.eq.s32.totalorder %v451, %v475
      %vm492 = vcmp.eq.s32.totalorder %v452, %v471
      %vm493 = vcmp.eq.s32.totalorder %v453, %v475
      %vm494 = vcmp.eq.s32.totalorder %v454, %v471
      %vm495 = vcmp.eq.s32.totalorder %v455, %v475
      %vm496 = vcmp.eq.s32.totalorder %v456, %v471
      %vm497 = vcmp.eq.s32.totalorder %v457, %v475
      %vm498 = vcmp.eq.s32.totalorder %v458, %v471
      %vm499 = vcmp.eq.s32.totalorder %v459, %v475
      %vm500 = vcmp.eq.s32.totalorder %v460, %v471
      %vm501 = vcmp.eq.s32.totalorder %v461, %v475
      %vm502 = vcmp.eq.s32.totalorder %v462, %v471
      %vm503 = vcmp.eq.s32.totalorder %v463, %v475
      %vm504 = vcmp.eq.s32.totalorder %v464, %v471
      %vm505 = vcmp.eq.s32.totalorder %v465, %v475
      %vm506 = vcmp.eq.s32.totalorder %v466, %v471
      %vm507 = vcmp.eq.s32.totalorder %v467, %v475
      %v508 = vsel %vm476, 1, 0
      %v509 = vsel %vm477, 1, 0
      %v510 = vsel %vm478, 1, 0
      %v511 = vsel %vm479, 1, 0
      %v512 = vsel %vm480, 1, 0
      %v513 = vsel %vm481, 1, 0
      %v514 = vsel %vm482, 1, 0
      %v515 = vsel %vm483, 1, 0
      %v516 = vsel %vm484, 1, 0
      %v517 = vsel %vm485, 1, 0
      %v518 = vsel %vm486, 1, 0
      %v519 = vsel %vm487, 1, 0
      %v520 = vsel %vm488, 1, 0
      %v521 = vsel %vm489, 1, 0
      %v522 = vsel %vm490, 1, 0
      %v523 = vsel %vm491, 1, 0
      %v524 = vsel %vm492, 1, 0
      %v525 = vsel %vm493, 1, 0
      %v526 = vsel %vm494, 1, 0
      %v527 = vsel %vm495, 1, 0
      %v528 = vsel %vm496, 1, 0
      %v529 = vsel %vm497, 1, 0
      %v530 = vsel %vm498, 1, 0
      %v531 = vsel %vm499, 1, 0
      %v532 = vsel %vm500, 1, 0
      %v533 = vsel %vm501, 1, 0
      %v534 = vsel %vm502, 1, 0
      %v535 = vsel %vm503, 1, 0
      %v536 = vsel %vm504, 1, 0
      %v537 = vsel %vm505, 1, 0
      %v538 = vsel %vm506, 1, 0
      %v539 = vsel %vm507, 1, 0
      %v540 = vcvt.s32.f32 %v508
      %v541 = vcvt.s32.f32 %v509
      %v542 = vcvt.s32.f32 %v510
      %v543 = vcvt.s32.f32 %v511
      %v544 = vcvt.s32.f32 %v512
      %v545 = vcvt.s32.f32 %v513
      %v546 = vcvt.s32.f32 %v514
      %v547 = vcvt.s32.f32 %v515
      %v548 = vcvt.s32.f32 %v516
      %v549 = vcvt.s32.f32 %v517
      %v550 = vcvt.s32.f32 %v518
      %v551 = vcvt.s32.f32 %v519
      %v552 = vcvt.s32.f32 %v520
      %v553 = vcvt.s32.f32 %v521
      %v554 = vcvt.s32.f32 %v522
      %v555 = vcvt.s32.f32 %v523
      %v556 = vcvt.s32.f32 %v524
      %v557 = vcvt.s32.f32 %v525
      %v558 = vcvt.s32.f32 %v526
      %v559 = vcvt.s32.f32 %v527
      %v560 = vcvt.s32.f32 %v528
      %v561 = vcvt.s32.f32 %v529
      %v562 = vcvt.s32.f32 %v530
      %v563 = vcvt.s32.f32 %v531
      %v564 = vcvt.s32.f32 %v532
      %v565 = vcvt.s32.f32 %v533
      %v566 = vcvt.s32.f32 %v534
      %v567 = vcvt.s32.f32 %v535
      %v568 = vcvt.s32.f32 %v536
      %v569 = vcvt.s32.f32 %v537
      %v570 = vcvt.s32.f32 %v538
      %v571 = vcvt.s32.f32 %v539
      %v572 = vld [vmem:[#allocation2] sm:$0xff]
      %v573 = vld [vmem:[#allocation2 + $0x8] sm:$0xff]
      %v574 = vld [vmem:[#allocation2 + $0x10] sm:$0xff]
      %v575 = vld [vmem:[#allocation2 + $0x18] sm:$0xff]
      %v576 = vld [vmem:[#allocation2 + $0x20] sm:$0xff]
      %v577 = vld [vmem:[#allocation2 + $0x28] sm:$0xff]
      %v578 = vld [vmem:[#allocation2 + $0x30] sm:$0xff]
      %v579 = vld [vmem:[#allocation2 + $0x38] sm:$0xff]
      %v580 = vld [vmem:[#allocation2 + $0x40] sm:$0xff]
      %v581 = vld [vmem:[#allocation2 + $0x48] sm:$0xff]
      %v582 = vld [vmem:[#allocation2 + $0x50] sm:$0xff]
      %v583 = vld [vmem:[#allocation2 + $0x58] sm:$0xff]
      %v584 = vld [vmem:[#allocation2 + $0x60] sm:$0xff]
      %v585 = vld [vmem:[#allocation2 + $0x68] sm:$0xff]
      %v586 = vld [vmem:[#allocation2 + $0x70] sm:$0xff]
      %v587 = vld [vmem:[#allocation2 + $0x78] sm:$0xff]
      %v588 = vld [vmem:[%s325] sm:$0xff]
      %v589 = vld [vmem:[%s325 + $0x8] sm:$0xff]
      %v590 = vld [vmem:[%s325 + $0x10] sm:$0xff]
      %v591 = vld [vmem:[%s325 + $0x18] sm:$0xff]
      %v592 = vld [vmem:[%s325 + $0x20] sm:$0xff]
      %v593 = vld [vmem:[%s325 + $0x28] sm:$0xff]
      %v594 = vld [vmem:[%s325 + $0x30] sm:$0xff]
      %v595 = vld [vmem:[%s325 + $0x38] sm:$0xff]
      %v596 = vld [vmem:[%s325 + $0x40] sm:$0xff]
      %v597 = vld [vmem:[%s325 + $0x48] sm:$0xff]
      %v598 = vld [vmem:[%s325 + $0x50] sm:$0xff]
      %v599 = vld [vmem:[%s325 + $0x58] sm:$0xff]
      %v600 = vld [vmem:[%s325 + $0x60] sm:$0xff]
      %v601 = vld [vmem:[%s325 + $0x68] sm:$0xff]
      %v602 = vld [vmem:[%s325 + $0x70] sm:$0xff]
      %v603 = vld [vmem:[%s325 + $0x78] sm:$0xff]
      %v604 = vld [vmem:[%s325 + $0x80] sm:$0xff]
      %v605 = vld [vmem:[%s325 + $0x88] sm:$0xff]
      %v606 = vld [vmem:[%s325 + $0x90] sm:$0xff]
      %v607 = vld [vmem:[%s325 + $0x98] sm:$0xff]
      %v608 = vld [vmem:[%s325 + $0xa0] sm:$0xff]
      %v609 = vld [vmem:[%s325 + $0xa8] sm:$0xff]
      %v610 = vld [vmem:[%s325 + $0xb0] sm:$0xff]
      %v611 = vld [vmem:[%s325 + $0xb8] sm:$0xff]
      %v612 = vld [vmem:[%s325 + $0xc0] sm:$0xff]
      %v613 = vld [vmem:[%s325 + $0xc8] sm:$0xff]
      %v614 = vld [vmem:[%s325 + $0xd0] sm:$0xff]
      %v615 = vld [vmem:[%s325 + $0xd8] sm:$0xff]
      %v616 = vld [vmem:[%s325 + $0xe0] sm:$0xff]
      %v617 = vld [vmem:[%s325 + $0xe8] sm:$0xff]
      %v618 = vld [vmem:[%s325 + $0xf0] sm:$0xff]
      %v619 = vld [vmem:[%s325 + $0xf8] sm:$0xff]
      %620 = vmatprep.subr.mxu0 0.0
      %621 = vmatpush1.msra.mxu0 %v603
      %622 = vmatprep.subr.mxu0 0.0
      %623 = vmatpush1.msra.mxu0 %v602
      %624 = vmatprep.subr.mxu0 0.0
      %625 = vmatpush1.msra.mxu0 %v601
      %626 = vmatprep.subr.mxu0 0.0
      %627 = vmatpush1.msra.mxu0 %v600
      %628 = vmatprep.subr.mxu0 0.0
      %629 = vmatpush1.msra.mxu0 %v599
      %630 = vmatprep.subr.mxu0 0.0
      %631 = vmatpush1.msra.mxu0 %v598
      %632 = vmatprep.subr.mxu0 0.0
      %633 = vmatpush1.msra.mxu0 %v597
      %634 = vmatprep.subr.mxu0 0.0
      %635 = vmatpush1.msra.mxu0 %v596
      %636 = vmatprep.subr.mxu0 0.0
      %637 = vmatpush1.msra.mxu0 %v595
      %638 = vmatprep.subr.mxu0 0.0
      %639 = vmatpush1.msra.mxu0 %v594
      %640 = vmatprep.subr.mxu0 0.0
      %641 = vmatpush1.msra.mxu0 %v593
      %642 = vmatprep.subr.mxu0 0.0
      %643 = vmatpush1.msra.mxu0 %v592
      %644 = vmatprep.subr.mxu0 0.0
      %645 = vmatpush1.msra.mxu0 %v591
      %646 = vmatprep.subr.mxu0 0.0
      %647 = vmatpush1.msra.mxu0 %v590
      %648 = vmatprep.subr.mxu0 0.0
      %649 = vmatpush1.msra.mxu0 %v589
      %650 = vmatprep.subr.mxu0 0.0
      %651 = vmatpush1.msra.mxu0 %v588
      %652 = vmatprep.subr.mxu0 0.0
      %653 = vmatpush2.msra.mxu0 %v619
      %654 = vmatprep.subr.mxu0 0.0
      %655 = vmatpush2.msra.mxu0 %v618
      %656 = vmatprep.subr.mxu0 0.0
      %657 = vmatpush2.msra.mxu0 %v617
      %658 = vmatprep.subr.mxu0 0.0
      %659 = vmatpush2.msra.mxu0 %v616
      %660 = vmatprep.subr.mxu0 0.0
      %661 = vmatpush2.msra.mxu0 %v615
      %662 = vmatprep.subr.mxu0 0.0
      %663 = vmatpush2.msra.mxu0 %v614
      %664 = vmatprep.subr.mxu0 0.0
      %665 = vmatpush2.msra.mxu0 %v613
      %666 = vmatprep.subr.mxu0 0.0
      %667 = vmatpush2.msra.mxu0 %v612
      %668 = vmatprep.subr.mxu0 0.0
      %669 = vmatpush2.msra.mxu0 %v611
      %670 = vmatprep.subr.mxu0 0.0
      %671 = vmatpush2.msra.mxu0 %v610
      %672 = vmatprep.subr.mxu0 0.0
      %673 = vmatpush2.msra.mxu0 %v609
      %674 = vmatprep.subr.mxu0 0.0
      %675 = vmatpush2.msra.mxu0 %v608
      %676 = vmatprep.subr.mxu0 0.0
      %677 = vmatpush2.msra.mxu0 %v607
      %678 = vmatprep.subr.mxu0 0.0
      %679 = vmatpush2.msra.mxu0 %v606
      %680 = vmatprep.subr.mxu0 0.0
      %681 = vmatpush2.msra.mxu0 %v605
      %682 = vmatprep.subr.mxu0 0.0
      %683 = vmatpush2.msra.mxu0 %v604
      %684 = vmatprep.mubr.f32.mxu0 %v541
      %685 = vmatmul.mubr.f32.gmra.mxu0 %v540
      %v686 = vpop.f32.mrf.mxu0
      %v687 = vadd.f32 0.0, %v686
      %v688 = vpop.f32.mrf.mxu0
      %689 = vmatprep.mubr.f32.mxu0 %v543
      %690 = vmatmul.mubr.f32.gmra.mxu0 %v542
      %v691 = vpop.f32.mrf.mxu0
      %v692 = vadd.f32 0.0, %v691
      %v693 = vpop.f32.mrf.mxu0
      %694 = vmatprep.mubr.f32.mxu0 %v545
      %695 = vmatmul.mubr.f32.gmra.mxu0 %v544
      %v696 = vpop.f32.mrf.mxu0
      %v697 = vadd.f32 0.0, %v696
      %v698 = vpop.f32.mrf.mxu0
      %699 = vmatprep.mubr.f32.mxu0 %v547
      %700 = vmatmul.mubr.f32.gmra.mxu0 %v546
      %v701 = vpop.f32.mrf.mxu0
      %v702 = vadd.f32 0.0, %v701
      %v703 = vpop.f32.mrf.mxu0
      %704 = vmatprep.mubr.f32.mxu0 %v549
      %705 = vmatmul.mubr.f32.gmra.mxu0 %v548
      %v706 = vpop.f32.mrf.mxu0
      %v707 = vadd.f32 0.0, %v706
      %v708 = vpop.f32.mrf.mxu0
      %709 = vmatprep.mubr.f32.mxu0 %v551
      %710 = vmatmul.mubr.f32.gmra.mxu0 %v550
      %v711 = vpop.f32.mrf.mxu0
      %v712 = vadd.f32 0.0, %v711
      %v713 = vpop.f32.mrf.mxu0
      %714 = vmatprep.mubr.f32.mxu0 %v553
      %715 = vmatmul.mubr.f32.gmra.mxu0 %v552
      %v716 = vpop.f32.mrf.mxu0
      %v717 = vadd.f32 0.0, %v716
      %v718 = vpop.f32.mrf.mxu0
      %719 = vmatprep.mubr.f32.mxu0 %v555
      %720 = vmatmul.mubr.f32.gmra.mxu0 %v554
      %v721 = vpop.f32.mrf.mxu0
      %v722 = vadd.f32 0.0, %v721
      %v723 = vpop.f32.mrf.mxu0
      %724 = vmatprep.mubr.f32.mxu0 %v557
      %725 = vmatmul.mubr.f32.gmra.mxu0 %v556
      %v726 = vpop.f32.mrf.mxu0
      %v727 = vadd.f32 0.0, %v726
      %v728 = vpop.f32.mrf.mxu0
      %729 = vmatprep.mubr.f32.mxu0 %v559
      %730 = vmatmul.mubr.f32.gmra.mxu0 %v558
      %v731 = vpop.f32.mrf.mxu0
      %v732 = vadd.f32 0.0, %v731
      %v733 = vpop.f32.mrf.mxu0
      %734 = vmatprep.mubr.f32.mxu0 %v561
      %735 = vmatmul.mubr.f32.gmra.mxu0 %v560
      %v736 = vpop.f32.mrf.mxu0
      %v737 = vadd.f32 0.0, %v736
      %v738 = vpop.f32.mrf.mxu0
      %739 = vmatprep.mubr.f32.mxu0 %v563
      %740 = vmatmul.mubr.f32.gmra.mxu0 %v562
      %v741 = vpop.f32.mrf.mxu0
      %v742 = vadd.f32 0.0, %v741
      %v743 = vpop.f32.mrf.mxu0
      %744 = vmatprep.mubr.f32.mxu0 %v565
      %745 = vmatmul.mubr.f32.gmra.mxu0 %v564
      %v746 = vpop.f32.mrf.mxu0
      %v747 = vadd.f32 0.0, %v746
      %v748 = vpop.f32.mrf.mxu0
      %749 = vmatprep.mubr.f32.mxu0 %v567
      %750 = vmatmul.mubr.f32.gmra.mxu0 %v566
      %v751 = vpop.f32.mrf.mxu0
      %v752 = vadd.f32 0.0, %v751
      %v753 = vpop.f32.mrf.mxu0
      %754 = vmatprep.mubr.f32.mxu0 %v569
      %755 = vmatmul.mubr.f32.gmra.mxu0 %v568
      %v756 = vpop.f32.mrf.mxu0
      %v757 = vadd.f32 0.0, %v756
      %v758 = vpop.f32.mrf.mxu0
      %759 = vmatprep.mubr.f32.mxu0 %v571
      %760 = vmatmul.mubr.f32.gmra.mxu0 %v570
      %v761 = vpop.f32.mrf.mxu0
      %v762 = vadd.f32 0.0, %v761
      %v763 = vpop.f32.mrf.mxu0
      %764 = vdwg.mxu0
      %v765 = vadd.f32 %v572, %v687
      %v766 = vadd.f32 %v573, %v692
      %v767 = vadd.f32 %v574, %v697
      %v768 = vadd.f32 %v575, %v702
      %v769 = vadd.f32 %v576, %v707
      %v770 = vadd.f32 %v577, %v712
      %v771 = vadd.f32 %v578, %v717
      %v772 = vadd.f32 %v579, %v722
      %v773 = vadd.f32 %v580, %v727
      %v774 = vadd.f32 %v581, %v732
      %v775 = vadd.f32 %v582, %v737
      %v776 = vadd.f32 %v583, %v742
      %v777 = vadd.f32 %v584, %v747
      %v778 = vadd.f32 %v585, %v752
      %v779 = vadd.f32 %v586, %v757
      %v780 = vadd.f32 %v587, %v762
      %vm781 = vcmask 261120
      %782 = vst.msk [vmem:[#allocation2] sm:$0xff] %vm781, %v765
      %783 = vst.msk [vmem:[#allocation2 + $0x8] sm:$0xff] %vm781, %v766
      %784 = vst.msk [vmem:[#allocation2 + $0x10] sm:$0xff] %vm781, %v767
      %785 = vst.msk [vmem:[#allocation2 + $0x18] sm:$0xff] %vm781, %v768
      %786 = vst.msk [vmem:[#allocation2 + $0x20] sm:$0xff] %vm781, %v769
      %787 = vst.msk [vmem:[#allocation2 + $0x28] sm:$0xff] %vm781, %v770
      %788 = vst.msk [vmem:[#allocation2 + $0x30] sm:$0xff] %vm781, %v771
      %789 = vst.msk [vmem:[#allocation2 + $0x38] sm:$0xff] %vm781, %v772
      %790 = vst.msk [vmem:[#allocation2 + $0x40] sm:$0xff] %vm781, %v773
      %791 = vst.msk [vmem:[#allocation2 + $0x48] sm:$0xff] %vm781, %v774
      %792 = vst.msk [vmem:[#allocation2 + $0x50] sm:$0xff] %vm781, %v775
      %793 = vst.msk [vmem:[#allocation2 + $0x58] sm:$0xff] %vm781, %v776
      %794 = vst.msk [vmem:[#allocation2 + $0x60] sm:$0xff] %vm781, %v777
      %795 = vst.msk [vmem:[#allocation2 + $0x68] sm:$0xff] %vm781, %v778
      %796 = vst.msk [vmem:[#allocation2 + $0x70] sm:$0xff] %vm781, %v779
      %797 = vst.msk [vmem:[#allocation2 + $0x78] sm:$0xff] %vm781, %v780
      %s798 = sld [smem:[#allocation8 + %s355]]
      %p799 = scmp.eq.s32.totalorder %s798, 1
      // Predicated region
      $region45: #{tpu_custom_call.1} parent=35 // pred_check
        %p800 = pneg %p799
      $region46: #{tpu_custom_call.1} parent=35 // pred_check_branch
        %802 = sbr.rel (%p800) target = $region48
      $region47: #{tpu_custom_call.1} parent=35 // pred_region
        %v803 = vld [vmem:[%s337] sm:$0xff]
        %v804 = vld [vmem:[%s337 + $0x8] sm:$0xff]
        %v805 = vld [vmem:[%s337 + $0x10] sm:$0xff]
        %v806 = vld [vmem:[%s337 + $0x18] sm:$0xff]
        %v807 = vld [vmem:[%s337 + $0x20] sm:$0xff]
        %v808 = vld [vmem:[%s337 + $0x28] sm:$0xff]
        %v809 = vld [vmem:[%s337 + $0x30] sm:$0xff]
        %v810 = vld [vmem:[%s337 + $0x38] sm:$0xff]
        %v811 = vld [vmem:[%s337 + $0x40] sm:$0xff]
        %v812 = vld [vmem:[%s337 + $0x48] sm:$0xff]
        %v813 = vld [vmem:[%s337 + $0x50] sm:$0xff]
        %v814 = vld [vmem:[%s337 + $0x58] sm:$0xff]
        %v815 = vld [vmem:[%s337 + $0x60] sm:$0xff]
        %v816 = vld [vmem:[%s337 + $0x68] sm:$0xff]
        %v817 = vld [vmem:[%s337 + $0x70] sm:$0xff]
        %v818 = vld [vmem:[%s337 + $0x78] sm:$0xff]
        %v819 = vld [vmem:[#allocation2] sm:$0xff]
        %v820 = vld [vmem:[#allocation2 + $0x8] sm:$0xff]
        %v821 = vld [vmem:[#allocation2 + $0x10] sm:$0xff]
        %v822 = vld [vmem:[#allocation2 + $0x18] sm:$0xff]
        %v823 = vld [vmem:[#allocation2 + $0x20] sm:$0xff]
        %v824 = vld [vmem:[#allocation2 + $0x28] sm:$0xff]
        %v825 = vld [vmem:[#allocation2 + $0x30] sm:$0xff]
        %v826 = vld [vmem:[#allocation2 + $0x38] sm:$0xff]
        %v827 = vld [vmem:[#allocation2 + $0x40] sm:$0xff]
        %v828 = vld [vmem:[#allocation2 + $0x48] sm:$0xff]
        %v829 = vld [vmem:[#allocation2 + $0x50] sm:$0xff]
        %v830 = vld [vmem:[#allocation2 + $0x58] sm:$0xff]
        %v831 = vld [vmem:[#allocation2 + $0x60] sm:$0xff]
        %v832 = vld [vmem:[#allocation2 + $0x68] sm:$0xff]
        %v833 = vld [vmem:[#allocation2 + $0x70] sm:$0xff]
        %v834 = vld [vmem:[#allocation2 + $0x78] sm:$0xff]
        %v835 = vadd.f32 %v803, %v819
        %v836 = vadd.f32 %v804, %v820
        %v837 = vadd.f32 %v805, %v821
        %v838 = vadd.f32 %v806, %v822
        %v839 = vadd.f32 %v807, %v823
        %v840 = vadd.f32 %v808, %v824
        %v841 = vadd.f32 %v809, %v825
        %v842 = vadd.f32 %v810, %v826
        %v843 = vadd.f32 %v811, %v827
        %v844 = vadd.f32 %v812, %v828
        %v845 = vadd.f32 %v813, %v829
        %v846 = vadd.f32 %v814, %v830
        %v847 = vadd.f32 %v815, %v831
        %v848 = vadd.f32 %v816, %v832
        %v849 = vadd.f32 %v817, %v833
        %v850 = vadd.f32 %v818, %v834
        %v851 = vld [vmem:[%s7] sm:$0xff]
        %v852 = vld [vmem:[%s7 + $0x8] sm:$0xff]
        %v853 = vld [vmem:[%s7 + $0x10] sm:$0xff]
        %v854 = vld [vmem:[%s7 + $0x18] sm:$0xff]
        %v856 = vsel %vm781, %v835, 0
        %v859 = vsel %vm781, %v836, 0
        %v862 = vsel %vm781, %v837, 0
        %v865 = vsel %vm781, %v838, 0
        %v868 = vsel %vm781, %v839, 0
        %v871 = vsel %vm781, %v840, 0
        %v874 = vsel %vm781, %v841, 0
        %v877 = vsel %vm781, %v842, 0
        %v880 = vsel %vm781, %v843, 0
        %v883 = vsel %vm781, %v844, 0
        %v886 = vsel %vm781, %v845, 0
        %v889 = vsel %vm781, %v846, 0
        %v892 = vsel %vm781, %v847, 0
        %v895 = vsel %vm781, %v848, 0
        %v898 = vsel %vm781, %v849, 0
        %v901 = vsel %vm781, %v850, 0
        %903 = vmatprep.subr.mxu0 0.0
        %904 = vmatpush1.msra.mxu0 0.0
        %905 = vmatprep.subr.mxu0 0.0
        %906 = vmatpush1.msra.mxu0 0.0
        %907 = vmatprep.subr.mxu0 0.0
        %908 = vmatpush1.msra.mxu0 0.0
        %909 = vmatprep.subr.mxu0 0.0
        %910 = vmatpush1.msra.mxu0 0.0
        %911 = vmatprep.subr.mxu0 0.0
        %912 = vmatpush1.msra.mxu0 0.0
        %913 = vmatprep.subr.mxu0 0.0
        %914 = vmatpush1.msra.mxu0 0.0
        %915 = vmatprep.subr.mxu0 0.0
        %916 = vmatpush1.msra.mxu0 0.0
        %917 = vmatprep.subr.mxu0 0.0
        %918 = vmatpush1.msra.mxu0 0.0
        %919 = vmatprep.subr.mxu0 0.0
        %920 = vmatpush1.msra.mxu0 0.0
        %921 = vmatprep.subr.mxu0 0.0
        %922 = vmatpush1.msra.mxu0 0.0
        %923 = vmatprep.subr.mxu0 0.0
        %924 = vmatpush1.msra.mxu0 0.0
        %925 = vmatprep.subr.mxu0 0.0
        %926 = vmatpush1.msra.mxu0 0.0
        %927 = vmatprep.subr.mxu0 0.0
        %928 = vmatpush1.msra.mxu0 %v854
        %929 = vmatprep.subr.mxu0 0.0
        %930 = vmatpush1.msra.mxu0 %v853
        %931 = vmatprep.subr.mxu0 0.0
        %932 = vmatpush1.msra.mxu0 %v852
        %933 = vmatprep.subr.mxu0 0.0
        %934 = vmatpush1.msra.mxu0 %v851
        %935 = vmatprep.subr.mxu0 0.0
        %936 = vmatpush2.msra.mxu0 0.0
        %937 = vmatprep.subr.mxu0 0.0
        %938 = vmatpush2.msra.mxu0 0.0
        %939 = vmatprep.subr.mxu0 0.0
        %940 = vmatpush2.msra.mxu0 0.0
        %941 = vmatprep.subr.mxu0 0.0
        %942 = vmatpush2.msra.mxu0 0.0
        %943 = vmatprep.subr.mxu0 0.0
        %944 = vmatpush2.msra.mxu0 0.0
        %945 = vmatprep.subr.mxu0 0.0
        %946 = vmatpush2.msra.mxu0 0.0
        %947 = vmatprep.subr.mxu0 0.0
        %948 = vmatpush2.msra.mxu0 0.0
        %949 = vmatprep.subr.mxu0 0.0
        %950 = vmatpush2.msra.mxu0 0.0
        %951 = vmatprep.subr.mxu0 0.0
        %952 = vmatpush2.msra.mxu0 0.0
        %953 = vmatprep.subr.mxu0 0.0
        %954 = vmatpush2.msra.mxu0 0.0
        %955 = vmatprep.subr.mxu0 0.0
        %956 = vmatpush2.msra.mxu0 0.0
        %957 = vmatprep.subr.mxu0 0.0
        %958 = vmatpush2.msra.mxu0 0.0
        %959 = vmatprep.subr.mxu0 0.0
        %960 = vmatpush2.msra.mxu0 0.0
        %961 = vmatprep.subr.mxu0 0.0
        %962 = vmatpush2.msra.mxu0 0.0
        %963 = vmatprep.subr.mxu0 0.0
        %964 = vmatpush2.msra.mxu0 0.0
        %965 = vmatprep.subr.mxu0 0.0
        %966 = vmatpush2.msra.mxu0 0.0
        %967 = vmatprep.mubr.f32.mxu0 0.0
        %968 = vmatmul.mubr.f32.gmra.mxu0 %v856
        %v969 = vpop.f32.mrf.mxu0
        %v970 = vadd.f32 0.0, %v969
        %v971 = vpop.f32.mrf.mxu0
        %972 = vmatprep.mubr.f32.mxu0 0.0
        %973 = vmatmul.mubr.f32.gmra.mxu0 %v859
        %v974 = vpop.f32.mrf.mxu0
        %v975 = vadd.f32 0.0, %v974
        %v976 = vpop.f32.mrf.mxu0
        %977 = vmatprep.mubr.f32.mxu0 0.0
        %978 = vmatmul.mubr.f32.gmra.mxu0 %v862
        %v979 = vpop.f32.mrf.mxu0
        %v980 = vadd.f32 0.0, %v979
        %v981 = vpop.f32.mrf.mxu0
        %982 = vmatprep.mubr.f32.mxu0 0.0
        %983 = vmatmul.mubr.f32.gmra.mxu0 %v865
        %v984 = vpop.f32.mrf.mxu0
        %v985 = vadd.f32 0.0, %v984
        %v986 = vpop.f32.mrf.mxu0
        %987 = vmatprep.mubr.f32.mxu0 0.0
        %988 = vmatmul.mubr.f32.gmra.mxu0 %v868
        %v989 = vpop.f32.mrf.mxu0
        %v990 = vadd.f32 0.0, %v989
        %v991 = vpop.f32.mrf.mxu0
        %992 = vmatprep.mubr.f32.mxu0 0.0
        %993 = vmatmul.mubr.f32.gmra.mxu0 %v871
        %v994 = vpop.f32.mrf.mxu0
        %v995 = vadd.f32 0.0, %v994
        %v996 = vpop.f32.mrf.mxu0
        %997 = vmatprep.mubr.f32.mxu0 0.0
        %998 = vmatmul.mubr.f32.gmra.mxu0 %v874
        %v999 = vpop.f32.mrf.mxu0
        %v1000 = vadd.f32 0.0, %v999
        %v1001 = vpop.f32.mrf.mxu0
        %1002 = vmatprep.mubr.f32.mxu0 0.0
        %1003 = vmatmul.mubr.f32.gmra.mxu0 %v877
        %v1004 = vpop.f32.mrf.mxu0
        %v1005 = vadd.f32 0.0, %v1004
        %v1006 = vpop.f32.mrf.mxu0
        %1007 = vmatprep.mubr.f32.mxu0 0.0
        %1008 = vmatmul.mubr.f32.gmra.mxu0 %v880
        %v1009 = vpop.f32.mrf.mxu0
        %v1010 = vadd.f32 0.0, %v1009
        %v1011 = vpop.f32.mrf.mxu0
        %1012 = vmatprep.mubr.f32.mxu0 0.0
        %1013 = vmatmul.mubr.f32.gmra.mxu0 %v883
        %v1014 = vpop.f32.mrf.mxu0
        %v1015 = vadd.f32 0.0, %v1014
        %v1016 = vpop.f32.mrf.mxu0
        %1017 = vmatprep.mubr.f32.mxu0 0.0
        %1018 = vmatmul.mubr.f32.gmra.mxu0 %v886
        %v1019 = vpop.f32.mrf.mxu0
        %v1020 = vadd.f32 0.0, %v1019
        %v1021 = vpop.f32.mrf.mxu0
        %1022 = vmatprep.mubr.f32.mxu0 0.0
        %1023 = vmatmul.mubr.f32.gmra.mxu0 %v889
        %v1024 = vpop.f32.mrf.mxu0
        %v1025 = vadd.f32 0.0, %v1024
        %v1026 = vpop.f32.mrf.mxu0
        %1027 = vmatprep.mubr.f32.mxu0 0.0
        %1028 = vmatmul.mubr.f32.gmra.mxu0 %v892
        %v1029 = vpop.f32.mrf.mxu0
        %v1030 = vadd.f32 0.0, %v1029
        %v1031 = vpop.f32.mrf.mxu0
        %1032 = vmatprep.mubr.f32.mxu0 0.0
        %1033 = vmatmul.mubr.f32.gmra.mxu0 %v895
        %v1034 = vpop.f32.mrf.mxu0
        %v1035 = vadd.f32 0.0, %v1034
        %v1036 = vpop.f32.mrf.mxu0
        %1037 = vmatprep.mubr.f32.mxu0 0.0
        %1038 = vmatmul.mubr.f32.gmra.mxu0 %v898
        %v1039 = vpop.f32.mrf.mxu0
        %v1040 = vadd.f32 0.0, %v1039
        %v1041 = vpop.f32.mrf.mxu0
        %1042 = vmatprep.mubr.f32.mxu0 0.0
        %1043 = vmatmul.mubr.f32.gmra.mxu0 %v901
        %v1044 = vpop.f32.mrf.mxu0
        %v1045 = vadd.f32 0.0, %v1044
        %v1046 = vpop.f32.mrf.mxu0
        %1047 = vdwg.mxu0
        %v1048 = vmax.f32 %v970, 0.0
        %v1049 = vmax.f32 %v975, 0.0
        %v1050 = vmax.f32 %v980, 0.0
        %v1051 = vmax.f32 %v985, 0.0
        %v1052 = vmax.f32 %v990, 0.0
        %v1053 = vmax.f32 %v995, 0.0
        %v1054 = vmax.f32 %v1000, 0.0
        %v1055 = vmax.f32 %v1005, 0.0
        %v1056 = vmax.f32 %v1010, 0.0
        %v1057 = vmax.f32 %v1015, 0.0
        %v1058 = vmax.f32 %v1020, 0.0
        %v1059 = vmax.f32 %v1025, 0.0
        %v1060 = vmax.f32 %v1030, 0.0
        %v1061 = vmax.f32 %v1035, 0.0
        %v1062 = vmax.f32 %v1040, 0.0
        %v1063 = vmax.f32 %v1045, 0.0
        %vm1064 = vcmask 392192
        %1065 = vst.msk [vmem:[%s349] sm:$0xff] %vm1064, %v1048
        %1066 = vst.msk [vmem:[%s349 + $0x8] sm:$0xff] %vm1064, %v1049
        %1067 = vst.msk [vmem:[%s349 + $0x10] sm:$0xff] %vm1064, %v1050
        %1068 = vst.msk [vmem:[%s349 + $0x18] sm:$0xff] %vm1064, %v1051
        %1069 = vst.msk [vmem:[%s349 + $0x20] sm:$0xff] %vm1064, %v1052
        %1070 = vst.msk [vmem:[%s349 + $0x28] sm:$0xff] %vm1064, %v1053
        %1071 = vst.msk [vmem:[%s349 + $0x30] sm:$0xff] %vm1064, %v1054
        %1072 = vst.msk [vmem:[%s349 + $0x38] sm:$0xff] %vm1064, %v1055
        %1073 = vst.msk [vmem:[%s349 + $0x40] sm:$0xff] %vm1064, %v1056
        %1074 = vst.msk [vmem:[%s349 + $0x48] sm:$0xff] %vm1064, %v1057
        %1075 = vst.msk [vmem:[%s349 + $0x50] sm:$0xff] %vm1064, %v1058
        %1076 = vst.msk [vmem:[%s349 + $0x58] sm:$0xff] %vm1064, %v1059
        %1077 = vst.msk [vmem:[%s349 + $0x60] sm:$0xff] %vm1064, %v1060
        %1078 = vst.msk [vmem:[%s349 + $0x68] sm:$0xff] %vm1064, %v1061
        %1079 = vst.msk [vmem:[%s349 + $0x70] sm:$0xff] %vm1064, %v1062
        %1080 = vst.msk [vmem:[%s349 + $0x78] sm:$0xff] %vm1064, %v1063
      $region48: #{tpu_custom_call.1} parent=35 // pred_fallthru
        _
      %s1081 = smul.u32 %s41, 3
      %s1082 = sadd.s32 %s1081, %s42
      %s1083 = sld [smem:[#allocation5 + %s1082]]
      %s1084 = smul.u32 16, %s1083
      %p1085 = scmp.lt.s32.totalorder %s1084, 31
      %s1086 = scalar_select %p1085, %s1084, 31
      %s1087 = smul.addr %s1086, 8
      %s1088 = scalar_lea.vmem %s8, %s1087
      // Predicated region
      $region49: #{tpu_custom_call.1} parent=35 // pred_check
        %p1089 = pneg %p190
      $region50: #{tpu_custom_call.1} parent=35 // pred_check_branch
        %1091 = sbr.rel (%p1089) target = $region52
      $region51: #{tpu_custom_call.1} parent=35 // pred_region
        %s1092 = smul.u32 %s41, 3
        %s1093 = sadd.s32 %s1092, %s42
        %s1094 = sld [smem:[#allocation5 + %s1093]]
        %s1095 = smul.u32 16, %s1094
      $region52: #{tpu_custom_call.1} parent=35 // pred_fallthru
        _
    $region36: #{tpu_custom_call.1} parent=5 // pred_fallthru
      _
    %p1096 = scmp.le.s32.totalorder 2, %s32
    // Predicated region
    $region53: #{tpu_custom_call.1} parent=5 // pred_check
      %p1097 = pneg %p1096
    $region54: #{tpu_custom_call.1} parent=5 // pred_check_branch
      %1099 = sbr.rel (%p1097) target = $region56
    $region55: #{tpu_custom_call.1} parent=5 // pred_region
      %s1100 = ssub.s32 %s32, 2
      // Predicated region
      $region57: #{tpu_custom_call.1} parent=55 // pred_check
        %p1101 = pneg %p196
      $region58: #{tpu_custom_call.1} parent=55 // pred_check_branch
        %1103 = sbr.rel (%p1101) target = $region60
      $region59: #{tpu_custom_call.1} parent=55 // pred_region
        %s1104 = smul.u32 %s43, 3
        %s1105 = sadd.s32 %s1104, %s44
        %s1106 = sld [smem:[#allocation5 + %s1105]]
        %s1107 = smul.u32 16, %s1106
        %p1108 = scmp.lt.s32.totalorder %s1107, 31
        %s1109 = scalar_select %p1108, %s1107, 31
        %s1110 = smul.addr %s1109, 8
        %s1111 = scalar_lea.vmem %s8, %s1110
      $region60: #{tpu_custom_call.1} parent=55 // pred_fallthru
        _
    $region56: #{tpu_custom_call.1} parent=5 // pred_fallthru
      _
  $region6: #{tpu_custom_call.1} parent=0 // loop_footer
    %s36 = sadd.s32 1, %s32
  $region7: #{tpu_custom_call.1} parent=0 // loop_footer_branch
    %31 = sbr.rel target = $region3
  $region8: #{tpu_custom_call.1} parent=0 // loop_exit
    _

</llo_original>
